<compile_context>
chip_gen: v7x
topology: tpu7x:2x2x1
jax: 0.10.0
libtpu: 0.0.40
codegen_flags: <defaults>
</compile_context>

<pallas_src>
import functools

import numpy as np

import jax
import jax.numpy as jnp
from jax.experimental import pallas as pl
from jax.experimental.pallas import tpu as pltpu

_LANE = 128


# ---------------------------------------------------------------------------
# Kernel
# ---------------------------------------------------------------------------
def gru_postprocessor_kernel(x_ref, h0_ref, wi_ref, wh_ref, b_ref, bhn_ref,
                             conv_ref, out_ref, hid_ref, *, hidden_pad,
                             n_layers):
    """GRU step (seq_len == 1) + pointwise Conv1d scoring.

    x_ref:    (tb, Hp)             input features at t=0 (batch tile)
    h0_ref:   (n_layers, tb, Hp)   initial hidden state
    wi_ref:   (n_layers, Hp, 3Hp)  fused input->hidden weights, gate order
                                   r|z|n, each gate padded to 128 lanes
    wh_ref:   (n_layers, Hp, 3Hp)  fused hidden->hidden weights
    b_ref:    (n_layers, 1, 3Hp)   fused biases: r/z thirds = b_i + b_h,
                                   n third = b_in only
    bhn_ref:  (n_layers, 1, Hp)    b_hn (stays inside the reset-gate product)
    conv_ref: (4,) SMEM            Conv1d(1->2, k=1): [w0, w1, b0, b1]
    out_ref:  (2, tb, Hp)          scores, channel-major (dense lane stores)
    hid_ref:  (n_layers, tb, Hp)   new hidden state (aliased with h0 in HBM)
    """
    Hp = hidden_pad
    wdt = wi_ref.dtype

    # Hoisted projections: every hidden-side matmul depends only on h0[l] (not
    # on the previous layer's output), so issue them -- plus layer-0's input
    # projection -- back-to-back to keep the MXU pipeline full before the
    # VPU/EUP gate math starts.
    h0 = [h0_ref[l] for l in range(n_layers)]
    gh_all = [jnp.dot(h0[l].astype(wdt), wh_ref[l],
                      preferred_element_type=jnp.float32)
              for l in range(n_layers)]
    h = x_ref[...]
    gi = jnp.dot(h.astype(wdt), wi_ref[0],
                 preferred_element_type=jnp.float32) + b_ref[0]

    for layer in range(n_layers):            # static unroll (compile-time L)
        if layer > 0:
            gi = jnp.dot(h.astype(wdt), wi_ref[layer],
                         preferred_element_type=jnp.float32) + b_ref[layer]
        gh = gh_all[layer]
        # 128-aligned gate slices (r | z | n) -> free vreg-boundary views.
        r = jax.nn.sigmoid(gi[:, 0 * Hp:1 * Hp] + gh[:, 0 * Hp:1 * Hp])
        z = jax.nn.sigmoid(gi[:, 1 * Hp:2 * Hp] + gh[:, 1 * Hp:2 * Hp])
        n = jnp.tanh(gi[:, 2 * Hp:3 * Hp]
                     + r * (gh[:, 2 * Hp:3 * Hp] + bhn_ref[layer]))
        h = z * (h0[layer] - n) + n          # == (1 - z) * n + z * h_prev
        hid_ref[layer] = h

    # Conv1d(in=1, out=2, k=1) epilogue: per-channel affine with SMEM scalars.
    # Channel-major output -> two dense (tb, Hp) lane stores (no masked vst).
    out_ref[0] = conv_ref[0] * h + conv_ref[2]
    out_ref[1] = conv_ref[1] * h + conv_ref[3]


# ---------------------------------------------------------------------------
# Wrapper helpers
# ---------------------------------------------------------------------------
@functools.lru_cache(maxsize=None)
def _single_buffering_supported() -> bool:
    """True if this jax/libtpu build accepts pl.Buffered(1) block specs
    (lets us stop double-buffering the grid-invariant weight operands)."""
    try:
        def _copy(x_ref, o_ref):
            o_ref[...] = x_ref[...]

        fn = pl.pallas_call(
            _copy,
            grid=(1,),
            in_specs=[pl.BlockSpec((8, 128), lambda i: (0, 0),
                                   pipeline_mode=pl.Buffered(1))],
            out_specs=pl.BlockSpec((8, 128), lambda i: (0, 0)),
            out_shape=jax.ShapeDtypeStruct((8, 128), jnp.float32),
        )
        jax.jit(fn).lower(jax.ShapeDtypeStruct((8, 128), jnp.float32)).compile()
        return True
    except Exception:
        return False


def _const_spec(block_shape):
    """BlockSpec for a grid-invariant operand (weights/biases): fetched once;
    single-buffered when supported (halves its VMEM footprint, key on v7x)."""
    index_map = lambda b: (0,) * len(block_shape)
    if _single_buffering_supported():
        return pl.BlockSpec(block_shape, index_map,
                            pipeline_mode=pl.Buffered(1))
    return pl.BlockSpec(block_shape, index_map)


def _pick_batch_tile(batch: int) -> int:
    if batch <= 8:
        return batch
    assert batch % 8 == 0, "pad the batch to a multiple of 8 for sublane-dense tiles"
    # MXU-native M tile (256 rows; v5e runs it as two 128-row passes) but keep
    # >= 2 grid blocks when we can so the "parallel" batch axis shards across
    # v7x's two TensorCores.
    half = batch // 2
    tb = min(256, half if half % 8 == 0 else batch)
    while batch % tb:
        tb -= 8
    return max(tb, 8)


def _block_vmem_bytes(block_shape, dtype):
    """Bytes of one (sublane,128)-tile-padded VMEM buffer for `block_shape`."""
    itemsize = np.dtype(dtype).itemsize
    shape = (1,) * max(0, 2 - len(block_shape)) + tuple(block_shape)
    *lead, rows, cols = shape
    sublanes = 8 * max(1, 4 // itemsize)     # f32: 8, bf16: 16, int8: 32
    rows_p = -(-rows // sublanes) * sublanes
    cols_p = -(-cols // _LANE) * _LANE
    return int(np.prod(lead, dtype=np.int64)) * rows_p * cols_p * itemsize


def _device_vmem_bytes() -> int:
    try:
        return int(pltpu.get_tpu_info().vmem_capacity_bytes)
    except Exception:
        return 64 * 2**20     # conservative default: v7x VMEM per TensorCore


# ---------------------------------------------------------------------------
# Wrapper
# ---------------------------------------------------------------------------
def postprocessor_forward(x, hidden, params):
    """Mirror of PostprocessorNet.forward(x, hidden) -> (out, hidden).

    x:      (B, 1, H)   batch_first GRU input; seq_len must be 1 because the
                        PyTorch module feeds the (B, seq, H) GRU output
                        straight into Conv1d(in_channels=1).
    hidden: (n_layers, B, H)
    returns out: (B, 2, H)  [PyTorch NCL], new_hidden: (n_layers, B, H)
    """
    B, T, H = x.shape
    assert T == 1, "Conv1d(in_channels=1) on the GRU output requires seq_len == 1"
    n_layers = hidden.shape[0]
    Hp = params["wi"].shape[1]        # lane-padded feature width (mult. of 128)
    G = params["wi"].shape[2]
    assert G == 3 * Hp and Hp >= H

    x2d = x[:, 0, :]
    if Hp != H:                       # zero-pad features onto the 128-lane grid
        x2d = jnp.pad(x2d, ((0, 0), (0, Hp - H)))
        hidden_p = jnp.pad(hidden, ((0, 0), (0, 0), (0, Hp - H)))
    else:
        hidden_p = hidden

    tb = _pick_batch_tile(B)
    grid = (B // tb,)

    # VMEM budget from the actual block footprint (weights single- or
    # double-buffered depending on capability) plus in-kernel f32 temporaries,
    # capped below the device's physical VMEM (v7x: 64 MiB per TensorCore).
    wbuf = 1 if _single_buffering_supported() else 2
    io_bytes = (
        2 * _block_vmem_bytes((tb, Hp), x2d.dtype)
        + 4 * _block_vmem_bytes((n_layers, tb, Hp), jnp.float32)     # h in + out
        + 2 * wbuf * _block_vmem_bytes((n_layers, Hp, G), params["wi"].dtype)
        + wbuf * (_block_vmem_bytes((n_layers, 1, G), jnp.float32)
                  + _block_vmem_bytes((n_layers, 1, Hp), jnp.float32))
        + 2 * _block_vmem_bytes((2, tb, Hp), jnp.float32))
    temp_bytes = 4 * ((n_layers + 1) * tb * 3 * Hp + 8 * tb * Hp)
    vmem_limit = int(max(8 * 2**20,
                         min(int(0.85 * _device_vmem_bytes()),
                             io_bytes + temp_bytes + (2 << 20))))

    out_cnl, new_hidden = pl.pallas_call(
        functools.partial(gru_postprocessor_kernel,
                          hidden_pad=Hp, n_layers=n_layers),
        grid=grid,
        in_specs=[
            pl.BlockSpec((tb, Hp), lambda b: (b, 0)),                 # x
            pl.BlockSpec((n_layers, tb, Hp), lambda b: (0, b, 0)),    # hidden
            _const_spec((n_layers, Hp, G)),                           # W_ih fused
            _const_spec((n_layers, Hp, G)),                           # W_hh fused
            _const_spec((n_layers, 1, G)),                            # fused biases
            _const_spec((n_layers, 1, Hp)),                           # b_hn
            pl.BlockSpec(memory_space=pltpu.MemorySpace.SMEM),        # conv scalars
        ],
        out_specs=(
            pl.BlockSpec((2, tb, Hp), lambda b: (0, b, 0)),           # scores (CNL)
            pl.BlockSpec((n_layers, tb, Hp), lambda b: (0, b, 0)),    # new hidden
        ),
        out_shape=(
            jax.ShapeDtypeStruct((2, B, Hp), jnp.float32),
            jax.ShapeDtypeStruct((n_layers, B, Hp), jnp.float32),
        ),
        input_output_aliases={1: 1},          # hidden state updated in place
        compiler_params=pltpu.CompilerParams(
            dimension_semantics=("parallel",),
            vmem_limit_bytes=vmem_limit,
        ),
    )(x2d, hidden_p, params["wi"], params["wh"], params["b"],
      params["b_hn"], params["conv"])

    # Channel-major (2, B, Hp) -> PyTorch NCL (B, 2, H); slices drop lane pad.
    out = jnp.transpose(out_cnl, (1, 0, 2))[:, :, :H]
    return out, new_hidden[:, :, :H]


# ---------------------------------------------------------------------------
# Parameters (PyTorch layout -> fused, lane-aligned kernel layout)
# ---------------------------------------------------------------------------
def init_torch_params(key, input_sz, n_layers=2):
    """Deterministic synthetic parameters in PyTorch's native layout."""
    H = input_sz
    k = 1.0 / float(np.sqrt(H))
    ks = jax.random.split(key, 6)
    w_ih = jax.random.uniform(ks[0], (n_layers, 3 * H, H), jnp.float32, -k, k)
    w_hh = jax.random.uniform(ks[1], (n_layers, 3 * H, H), jnp.float32, -k, k)
    b_ih = jax.random.uniform(ks[2], (n_layers, 3 * H), jnp.float32, -k, k)
    b_hh = jax.random.uniform(ks[3], (n_layers, 3 * H), jnp.float32, -k, k)
    conv_w = jax.random.uniform(ks[4], (2, 1, 1), jnp.float32, -1.0, 1.0)
    conv_b = jax.random.uniform(ks[5], (2,), jnp.float32, -1.0, 1.0)
    return dict(w_ih=w_ih, w_hh=w_hh, b_ih=b_ih, b_hh=b_hh,
                conv_w=conv_w, conv_b=conv_b)


def pack_params(tp, weight_dtype=jnp.bfloat16):
    """Fuse the r|z|n gates along lanes, pad each gate to a 128-lane boundary,
    pre-sum the r/z biases, and cast weights for the MXU."""
    L, threeH, H = tp["w_ih"].shape
    assert threeH == 3 * H
    Hp = -(-H // _LANE) * _LANE

    def fuse_weight(w):                                  # (L,3H,H) -> (L,Hp,3Hp)
        w = w.reshape(L, 3, H, H)                        # (L, gate, out, in)
        w = jnp.transpose(w, (0, 3, 1, 2))               # (L, in, gate, out)
        w = jnp.pad(w, ((0, 0), (0, Hp - H), (0, 0), (0, Hp - H)))
        return w.reshape(L, Hp, 3 * Hp).astype(weight_dtype)

    def pad_gate_bias(b):                                # (L,3H) -> (L,3,Hp)
        return jnp.pad(b.astype(jnp.float32).reshape(L, 3, H),
                       ((0, 0), (0, 0), (0, Hp - H)))

    bi = pad_gate_bias(tp["b_ih"])
    bh = pad_gate_bias(tp["b_hh"])
    # r/z biases pre-summed; the n gate keeps b_in here and b_hn separate
    # because b_hn must stay inside the reset-gate product.
    b_fused = jnp.concatenate(
        [bi[:, 0:1] + bh[:, 0:1], bi[:, 1:2] + bh[:, 1:2], bi[:, 2:3]],
        axis=1).reshape(L, 1, 3 * Hp)
    b_hn = bh[:, 2].reshape(L, 1, Hp)

    conv = jnp.concatenate([tp["conv_w"].reshape(2),
                            tp["conv_b"].reshape(2)]).astype(jnp.float32)

    return dict(wi=fuse_weight(tp["w_ih"]), wh=fuse_weight(tp["w_hh"]),
                b=b_fused, b_hn=b_hn, conv=conv)


# ---------------------------------------------------------------------------
# Pure-JAX references
# ---------------------------------------------------------------------------
def reference_forward_packed(x, hidden, packed):
    """Same math as the kernel (same bf16 weights, same lane padding)."""
    B, _, H = x.shape
    L = hidden.shape[0]
    Hp = packed["wi"].shape[1]
    wdt = packed["wi"].dtype
    h = jnp.pad(x[:, 0, :], ((0, 0), (0, Hp - H)))
    h0 = jnp.pad(hidden, ((0, 0), (0, 0), (0, Hp - H)))
    gh_all = [jnp.dot(h0[l].astype(wdt), packed["wh"][l],
                      preferred_element_type=jnp.float32) for l in range(L)]
    new_hidden = []
    for l in range(L):
        gi = jnp.dot(h.astype(wdt), packed["wi"][l],
                     preferred_element_type=jnp.float32) + packed["b"][l]
        gh = gh_all[l]
        r = jax.nn.sigmoid(gi[:, :Hp] + gh[:, :Hp])
        z = jax.nn.sigmoid(gi[:, Hp:2 * Hp] + gh[:, Hp:2 * Hp])
        n = jnp.tanh(gi[:, 2 * Hp:] + r * (gh[:, 2 * Hp:] + packed["b_hn"][l]))
        h = z * (h0[l] - n) + n
        new_hidden.append(h)
    w0, w1, b0, b1 = packed["conv"]
    out = jnp.stack([w0 * h + b0, w1 * h + b1], axis=1)      # (B, 2, Hp)
    return out[:, :, :H], jnp.stack(new_hidden, 0)[:, :, :H]


def reference_forward_torch_f32(x, hidden, tp):
    """Full-f32 reference directly from the PyTorch-layout parameters."""
    H = x.shape[-1]
    h = x[:, 0, :]
    new_hidden = []
    for layer in range(hidden.shape[0]):
        hp = hidden[layer]
        gi = h @ tp["w_ih"][layer].T + tp["b_ih"][layer]
        gh = hp @ tp["w_hh"][layer].T + tp["b_hh"][layer]
        r = jax.nn.sigmoid(gi[:, :H] + gh[:, :H])
        z = jax.nn.sigmoid(gi[:, H:2 * H] + gh[:, H:2 * H])
        n = jnp.tanh(gi[:, 2 * H:] + r * gh[:, 2 * H:])
        h = (1.0 - z) * n + z * hp
        new_hidden.append(h)
    out = (tp["conv_w"].reshape(1, 2, 1) * h[:, None, :]
           + tp["conv_b"].reshape(1, 2, 1))
    return out, jnp.stack(new_hidden, axis=0)


# ---------------------------------------------------------------------------
# Demo / self-test
# ---------------------------------------------------------------------------
if __name__ == "__main__":
    B, T, H, n_layers = 2, 1, 32, 2
    key = jax.random.PRNGKey(0)
    k_x, k_p = jax.random.split(key, 2)

    x = jax.random.normal(k_x, (B, T, H), jnp.float32)
    hidden = jnp.zeros((n_layers, B, H), jnp.float32)  # PostprocessorNet.init_hidden
    torch_params = init_torch_params(k_p, H, n_layers)
    params = pack_params(torch_params, weight_dtype=jnp.bfloat16)

    _single_buffering_supported()     # run the capability probe eagerly (cached)

    fwd = jax.jit(postprocessor_forward)
    out, new_hidden = fwd(x, hidden, params)
    jax.block_until_ready((out, new_hidden))

    assert out.shape == (B, 2, H), out.shape
    assert new_hidden.shape == (n_layers, B, H), new_hidden.shape

    # Tight check against a pure-JAX clone of the kernel math (same bf16 weights).
    out_ref, hid_ref = reference_forward_packed(x, hidden, params)
    assert jnp.allclose(out, out_ref, atol=5e-3, rtol=5e-3), \
        float(jnp.max(jnp.abs(out - out_ref)))
    assert jnp.allclose(new_hidden, hid_ref, atol=5e-3, rtol=5e-3), \
        float(jnp.max(jnp.abs(new_hidden - hid_ref)))

    # Cross-check against full-f32 PyTorch-layout math (bf16-weight tolerance).
    out_f32, hid_f32 = reference_forward_torch_f32(x, hidden, torch_params)
    assert jnp.allclose(out, out_f32, atol=5e-2, rtol=5e-2), \
        float(jnp.max(jnp.abs(out - out_f32)))
    assert jnp.allclose(new_hidden, hid_f32, atol=5e-2, rtol=5e-2), \
        float(jnp.max(jnp.abs(new_hidden - hid_f32)))

    print("KERNEL_OK")
</pallas_src>

<mosaic_0001>
module attributes {stable_mosaic.version = 11 : i64} {
  func.func @gru_postprocessor_kernel(%arg0: i32, %arg1: memref<2x128xf32, #tpu.memory_space<vmem>>, %arg2: memref<2x2x128xf32, #tpu.memory_space<vmem>>, %arg3: memref<2x128x384xbf16, #tpu.memory_space<vmem>>, %arg4: memref<2x128x384xbf16, #tpu.memory_space<vmem>>, %arg5: memref<2x1x384xf32, #tpu.memory_space<vmem>>, %arg6: memref<2x1x128xf32, #tpu.memory_space<vmem>>, %arg7: memref<4xf32, #tpu.memory_space<smem>>, %arg8: memref<2x2x128xf32, #tpu.memory_space<vmem>>, %arg9: memref<2x2x128xf32, #tpu.memory_space<vmem>>) attributes {dimension_semantics = [#tpu.dimension_semantics<parallel>], iteration_bounds = array<i64: 1>, scalar_prefetch = 0 : i64, scratch_operands = 0 : i64, tpu.core_type = #tpu.core_type<tc>, window_params = [{transform_indices = @transform_0, window_bounds = array<i64: 2, 128>}, {transform_indices = @transform_1, window_bounds = array<i64: 2, 2, 128>}, {pipeline_mode = #tpu.pipeline_mode<synchronous>, transform_indices = @transform_2, window_bounds = array<i64: 2, 128, 384>}, {pipeline_mode = #tpu.pipeline_mode<synchronous>, transform_indices = @transform_3, window_bounds = array<i64: 2, 128, 384>}, {pipeline_mode = #tpu.pipeline_mode<synchronous>, transform_indices = @transform_4, window_bounds = array<i64: 2, 1, 384>}, {pipeline_mode = #tpu.pipeline_mode<synchronous>, transform_indices = @transform_5, window_bounds = array<i64: 2, 1, 128>}, {transform_indices = @transform_6, window_bounds = array<i64: 4>}, {transform_indices = @transform_7, window_bounds = array<i64: 2, 2, 128>}, {transform_indices = @transform_8, window_bounds = array<i64: 2, 2, 128>}]} {
    %c0 = arith.constant 0 : index
    %c0_0 = arith.constant 0 : index
    %c0_1 = arith.constant 0 : index
    %0 = vector.load %arg2[%c0, %c0_0, %c0_1] : memref<2x2x128xf32, #tpu.memory_space<vmem>>, vector<1x2x128xf32>
    %1 = vector.shape_cast %0 : vector<1x2x128xf32> to vector<2x128xf32>
    %c1 = arith.constant 1 : index
    %c0_2 = arith.constant 0 : index
    %c0_3 = arith.constant 0 : index
    %2 = vector.load %arg2[%c1, %c0_2, %c0_3] : memref<2x2x128xf32, #tpu.memory_space<vmem>>, vector<1x2x128xf32>
    %3 = vector.shape_cast %2 : vector<1x2x128xf32> to vector<2x128xf32>
    %4 = arith.truncf %1 : vector<2x128xf32> to vector<2x128xbf16>
    %c0_4 = arith.constant 0 : index
    %c0_5 = arith.constant 0 : index
    %c0_6 = arith.constant 0 : index
    %5 = vector.load %arg4[%c0_4, %c0_5, %c0_6] : memref<2x128x384xbf16, #tpu.memory_space<vmem>>, vector<1x128x384xbf16>
    %6 = vector.shape_cast %5 : vector<1x128x384xbf16> to vector<128x384xbf16>
    %cst = arith.constant dense<0.000000e+00> : vector<2x384xf32>
    %7 = tpu.matmul %4, %6, %cst {dimension_numbers = #tpu.dot_dimension_numbers<[1], [0], [0], [1], [0, 0, 1, 1], [], []>} : vector<2x128xbf16>, vector<128x384xbf16>, vector<2x384xf32> -> vector<2x384xf32>
    %8 = arith.truncf %3 : vector<2x128xf32> to vector<2x128xbf16>
    %c1_7 = arith.constant 1 : index
    %c0_8 = arith.constant 0 : index
    %c0_9 = arith.constant 0 : index
    %9 = vector.load %arg4[%c1_7, %c0_8, %c0_9] : memref<2x128x384xbf16, #tpu.memory_space<vmem>>, vector<1x128x384xbf16>
    %10 = vector.shape_cast %9 : vector<1x128x384xbf16> to vector<128x384xbf16>
    %cst_10 = arith.constant dense<0.000000e+00> : vector<2x384xf32>
    %11 = tpu.matmul %8, %10, %cst_10 {dimension_numbers = #tpu.dot_dimension_numbers<[1], [0], [0], [1], [0, 0, 1, 1], [], []>} : vector<2x128xbf16>, vector<128x384xbf16>, vector<2x384xf32> -> vector<2x384xf32>
    %c0_11 = arith.constant 0 : index
    %c0_12 = arith.constant 0 : index
    %12 = vector.load %arg1[%c0_11, %c0_12] : memref<2x128xf32, #tpu.memory_space<vmem>>, vector<2x128xf32>
    %13 = arith.truncf %12 : vector<2x128xf32> to vector<2x128xbf16>
    %c0_13 = arith.constant 0 : index
    %c0_14 = arith.constant 0 : index
    %c0_15 = arith.constant 0 : index
    %14 = vector.load %arg3[%c0_13, %c0_14, %c0_15] : memref<2x128x384xbf16, #tpu.memory_space<vmem>>, vector<1x128x384xbf16>
    %15 = vector.shape_cast %14 : vector<1x128x384xbf16> to vector<128x384xbf16>
    %cst_16 = arith.constant dense<0.000000e+00> : vector<2x384xf32>
    %16 = tpu.matmul %13, %15, %cst_16 {dimension_numbers = #tpu.dot_dimension_numbers<[1], [0], [0], [1], [0, 0, 1, 1], [], []>} : vector<2x128xbf16>, vector<128x384xbf16>, vector<2x384xf32> -> vector<2x384xf32>
    %c0_17 = arith.constant 0 : index
    %c0_18 = arith.constant 0 : index
    %c0_19 = arith.constant 0 : index
    %17 = vector.load %arg5[%c0_17, %c0_18, %c0_19] : memref<2x1x384xf32, #tpu.memory_space<vmem>>, vector<1x1x384xf32>
    %18 = vector.shape_cast %17 : vector<1x1x384xf32> to vector<1x384xf32>
    %19 = vector.broadcast %18 : vector<1x384xf32> to vector<2x384xf32>
    %20 = arith.addf %16, %19 : vector<2x384xf32>
    %21 = vector.extract_strided_slice %20 {offsets = [0, 0], sizes = [2, 128], strides = [1, 1]} : vector<2x384xf32> to vector<2x128xf32>
    %22 = vector.extract_strided_slice %7 {offsets = [0, 0], sizes = [2, 128], strides = [1, 1]} : vector<2x384xf32> to vector<2x128xf32>
    %23 = arith.addf %21, %22 : vector<2x128xf32>
    %24 = arith.negf %23 : vector<2x128xf32>
    %25 = math.exp %24 : vector<2x128xf32>
    %cst_20 = arith.constant 1.000000e+00 : f32
    %26 = vector.broadcast %cst_20 : f32 to vector<2x128xf32>
    %27 = arith.addf %26, %25 : vector<2x128xf32>
    %28 = arith.divf %26, %27 : vector<2x128xf32>
    %29 = vector.extract_strided_slice %20 {offsets = [0, 128], sizes = [2, 128], strides = [1, 1]} : vector<2x384xf32> to vector<2x128xf32>
    %30 = vector.extract_strided_slice %7 {offsets = [0, 128], sizes = [2, 128], strides = [1, 1]} : vector<2x384xf32> to vector<2x128xf32>
    %31 = arith.addf %29, %30 : vector<2x128xf32>
    %32 = arith.negf %31 : vector<2x128xf32>
    %33 = math.exp %32 : vector<2x128xf32>
    %cst_21 = arith.constant 1.000000e+00 : f32
    %34 = vector.broadcast %cst_21 : f32 to vector<2x128xf32>
    %35 = arith.addf %34, %33 : vector<2x128xf32>
    %36 = arith.divf %34, %35 : vector<2x128xf32>
    %37 = vector.extract_strided_slice %20 {offsets = [0, 256], sizes = [2, 128], strides = [1, 1]} : vector<2x384xf32> to vector<2x128xf32>
    %38 = vector.extract_strided_slice %7 {offsets = [0, 256], sizes = [2, 128], strides = [1, 1]} : vector<2x384xf32> to vector<2x128xf32>
    %c0_22 = arith.constant 0 : index
    %c0_23 = arith.constant 0 : index
    %c0_24 = arith.constant 0 : index
    %39 = vector.load %arg6[%c0_22, %c0_23, %c0_24] : memref<2x1x128xf32, #tpu.memory_space<vmem>>, vector<1x1x128xf32>
    %40 = vector.shape_cast %39 : vector<1x1x128xf32> to vector<1x128xf32>
    %41 = vector.broadcast %40 : vector<1x128xf32> to vector<2x128xf32>
    %42 = arith.addf %38, %41 : vector<2x128xf32>
    %43 = arith.mulf %28, %42 : vector<2x128xf32>
    %44 = arith.addf %37, %43 : vector<2x128xf32>
    %45 = math.tanh %44 : vector<2x128xf32>
    %46 = arith.subf %1, %45 : vector<2x128xf32>
    %47 = arith.mulf %36, %46 : vector<2x128xf32>
    %48 = arith.addf %47, %45 : vector<2x128xf32>
    %c0_25 = arith.constant 0 : index
    %c0_26 = arith.constant 0 : index
    %c0_27 = arith.constant 0 : index
    %49 = vector.load %arg9[%c0_25, %c0_26, %c0_27] : memref<2x2x128xf32, #tpu.memory_space<vmem>>, vector<1x2x128xf32>
    %50 = vector.shape_cast %49 : vector<1x2x128xf32> to vector<2x128xf32>
    %51 = vector.shape_cast %48 : vector<2x128xf32> to vector<1x2x128xf32>
    tpu.vector_store %arg9[%c0_25, %c0_26, %c0_27], %51 {strides = array<i32>} : memref<2x2x128xf32, #tpu.memory_space<vmem>>, vector<1x2x128xf32>,
    %52 = arith.truncf %48 : vector<2x128xf32> to vector<2x128xbf16>
    %c1_28 = arith.constant 1 : index
    %c0_29 = arith.constant 0 : index
    %c0_30 = arith.constant 0 : index
    %53 = vector.load %arg3[%c1_28, %c0_29, %c0_30] : memref<2x128x384xbf16, #tpu.memory_space<vmem>>, vector<1x128x384xbf16>
    %54 = vector.shape_cast %53 : vector<1x128x384xbf16> to vector<128x384xbf16>
    %cst_31 = arith.constant dense<0.000000e+00> : vector<2x384xf32>
    %55 = tpu.matmul %52, %54, %cst_31 {dimension_numbers = #tpu.dot_dimension_numbers<[1], [0], [0], [1], [0, 0, 1, 1], [], []>} : vector<2x128xbf16>, vector<128x384xbf16>, vector<2x384xf32> -> vector<2x384xf32>
    %c1_32 = arith.constant 1 : index
    %c0_33 = arith.constant 0 : index
    %c0_34 = arith.constant 0 : index
    %56 = vector.load %arg5[%c1_32, %c0_33, %c0_34] : memref<2x1x384xf32, #tpu.memory_space<vmem>>, vector<1x1x384xf32>
    %57 = vector.shape_cast %56 : vector<1x1x384xf32> to vector<1x384xf32>
    %58 = vector.broadcast %57 : vector<1x384xf32> to vector<2x384xf32>
    %59 = arith.addf %55, %58 : vector<2x384xf32>
    %60 = vector.extract_strided_slice %59 {offsets = [0, 0], sizes = [2, 128], strides = [1, 1]} : vector<2x384xf32> to vector<2x128xf32>
    %61 = vector.extract_strided_slice %11 {offsets = [0, 0], sizes = [2, 128], strides = [1, 1]} : vector<2x384xf32> to vector<2x128xf32>
    %62 = arith.addf %60, %61 : vector<2x128xf32>
    %63 = arith.negf %62 : vector<2x128xf32>
    %64 = math.exp %63 : vector<2x128xf32>
    %cst_35 = arith.constant 1.000000e+00 : f32
    %65 = vector.broadcast %cst_35 : f32 to vector<2x128xf32>
    %66 = arith.addf %65, %64 : vector<2x128xf32>
    %67 = arith.divf %65, %66 : vector<2x128xf32>
    %68 = vector.extract_strided_slice %59 {offsets = [0, 128], sizes = [2, 128], strides = [1, 1]} : vector<2x384xf32> to vector<2x128xf32>
    %69 = vector.extract_strided_slice %11 {offsets = [0, 128], sizes = [2, 128], strides = [1, 1]} : vector<2x384xf32> to vector<2x128xf32>
    %70 = arith.addf %68, %69 : vector<2x128xf32>
    %71 = arith.negf %70 : vector<2x128xf32>
    %72 = math.exp %71 : vector<2x128xf32>
    %cst_36 = arith.constant 1.000000e+00 : f32
    %73 = vector.broadcast %cst_36 : f32 to vector<2x128xf32>
    %74 = arith.addf %73, %72 : vector<2x128xf32>
    %75 = arith.divf %73, %74 : vector<2x128xf32>
    %76 = vector.extract_strided_slice %59 {offsets = [0, 256], sizes = [2, 128], strides = [1, 1]} : vector<2x384xf32> to vector<2x128xf32>
    %77 = vector.extract_strided_slice %11 {offsets = [0, 256], sizes = [2, 128], strides = [1, 1]} : vector<2x384xf32> to vector<2x128xf32>
    %c1_37 = arith.constant 1 : index
    %c0_38 = arith.constant 0 : index
    %c0_39 = arith.constant 0 : index
    %78 = vector.load %arg6[%c1_37, %c0_38, %c0_39] : memref<2x1x128xf32, #tpu.memory_space<vmem>>, vector<1x1x128xf32>
    %79 = vector.shape_cast %78 : vector<1x1x128xf32> to vector<1x128xf32>
    %80 = vector.broadcast %79 : vector<1x128xf32> to vector<2x128xf32>
    %81 = arith.addf %77, %80 : vector<2x128xf32>
    %82 = arith.mulf %67, %81 : vector<2x128xf32>
    %83 = arith.addf %76, %82 : vector<2x128xf32>
    %84 = math.tanh %83 : vector<2x128xf32>
    %85 = arith.subf %3, %84 : vector<2x128xf32>
    %86 = arith.mulf %75, %85 : vector<2x128xf32>
    %87 = arith.addf %86, %84 : vector<2x128xf32>
    %c1_40 = arith.constant 1 : index
    %c0_41 = arith.constant 0 : index
    %c0_42 = arith.constant 0 : index
    %88 = vector.load %arg9[%c1_40, %c0_41, %c0_42] : memref<2x2x128xf32, #tpu.memory_space<vmem>>, vector<1x2x128xf32>
    %89 = vector.shape_cast %88 : vector<1x2x128xf32> to vector<2x128xf32>
    %90 = vector.shape_cast %87 : vector<2x128xf32> to vector<1x2x128xf32>
    tpu.vector_store %arg9[%c1_40, %c0_41, %c0_42], %90 {strides = array<i32>} : memref<2x2x128xf32, #tpu.memory_space<vmem>>, vector<1x2x128xf32>,
    %c0_43 = arith.constant 0 : index
    %91 = memref.load %arg7[%c0_43] : memref<4xf32, #tpu.memory_space<smem>>
    %92 = vector.broadcast %91 : f32 to vector<2x128xf32>
    %93 = arith.mulf %92, %87 : vector<2x128xf32>
    %c2 = arith.constant 2 : index
    %94 = memref.load %arg7[%c2] : memref<4xf32, #tpu.memory_space<smem>>
    %95 = vector.broadcast %94 : f32 to vector<2x128xf32>
    %96 = arith.addf %93, %95 : vector<2x128xf32>
    %c0_44 = arith.constant 0 : index
    %c0_45 = arith.constant 0 : index
    %c0_46 = arith.constant 0 : index
    %97 = vector.load %arg8[%c0_44, %c0_45, %c0_46] : memref<2x2x128xf32, #tpu.memory_space<vmem>>, vector<1x2x128xf32>
    %98 = vector.shape_cast %97 : vector<1x2x128xf32> to vector<2x128xf32>
    %99 = vector.shape_cast %96 : vector<2x128xf32> to vector<1x2x128xf32>
    tpu.vector_store %arg8[%c0_44, %c0_45, %c0_46], %99 {strides = array<i32>} : memref<2x2x128xf32, #tpu.memory_space<vmem>>, vector<1x2x128xf32>,
    %c1_47 = arith.constant 1 : index
    %100 = memref.load %arg7[%c1_47] : memref<4xf32, #tpu.memory_space<smem>>
    %101 = vector.broadcast %100 : f32 to vector<2x128xf32>
    %102 = arith.mulf %101, %87 : vector<2x128xf32>
    %c3 = arith.constant 3 : index
    %103 = memref.load %arg7[%c3] : memref<4xf32, #tpu.memory_space<smem>>
    %104 = vector.broadcast %103 : f32 to vector<2x128xf32>
    %105 = arith.addf %102, %104 : vector<2x128xf32>
    %c1_48 = arith.constant 1 : index
    %c0_49 = arith.constant 0 : index
    %c0_50 = arith.constant 0 : index
    %106 = vector.load %arg8[%c1_48, %c0_49, %c0_50] : memref<2x2x128xf32, #tpu.memory_space<vmem>>, vector<1x2x128xf32>
    %107 = vector.shape_cast %106 : vector<1x2x128xf32> to vector<2x128xf32>
    %108 = vector.shape_cast %105 : vector<2x128xf32> to vector<1x2x128xf32>
    tpu.vector_store %arg8[%c1_48, %c0_49, %c0_50], %108 {strides = array<i32>} : memref<2x2x128xf32, #tpu.memory_space<vmem>>, vector<1x2x128xf32>,
    return
  }
  func.func @transform_0(%arg0: i32) -> (i32, i32) {
    %c0_i32 = arith.constant 0 : i32
    %c0_i32_0 = arith.constant 0 : i32
    return %arg0, %c0_i32 : i32, i32
  }
  func.func @transform_1(%arg0: i32) -> (i32, i32, i32) {
    %c0_i32 = arith.constant 0 : i32
    %c0_i32_0 = arith.constant 0 : i32
    %c0_i32_1 = arith.constant 0 : i32
    return %c0_i32, %arg0, %c0_i32_0 : i32, i32, i32
  }
  func.func @transform_2(%arg0: i32) -> (i32, i32, i32) {
    %c0_i32 = arith.constant 0 : i32
    %c0_i32_0 = arith.constant 0 : i32
    %c0_i32_1 = arith.constant 0 : i32
    %c0_i32_2 = arith.constant 0 : i32
    return %c0_i32, %c0_i32_0, %c0_i32_1 : i32, i32, i32
  }
  func.func @transform_3(%arg0: i32) -> (i32, i32, i32) {
    %c0_i32 = arith.constant 0 : i32
    %c0_i32_0 = arith.constant 0 : i32
    %c0_i32_1 = arith.constant 0 : i32
    %c0_i32_2 = arith.constant 0 : i32
    return %c0_i32, %c0_i32_0, %c0_i32_1 : i32, i32, i32
  }
  func.func @transform_4(%arg0: i32) -> (i32, i32, i32) {
    %c0_i32 = arith.constant 0 : i32
    %c0_i32_0 = arith.constant 0 : i32
    %c0_i32_1 = arith.constant 0 : i32
    %c0_i32_2 = arith.constant 0 : i32
    return %c0_i32, %c0_i32_0, %c0_i32_1 : i32, i32, i32
  }
  func.func @transform_5(%arg0: i32) -> (i32, i32, i32) {
    %c0_i32 = arith.constant 0 : i32
    %c0_i32_0 = arith.constant 0 : i32
    %c0_i32_1 = arith.constant 0 : i32
    %c0_i32_2 = arith.constant 0 : i32
    return %c0_i32, %c0_i32_0, %c0_i32_1 : i32, i32, i32
  }
  func.func @transform_6(%arg0: i32) -> i32 {
    %c0_i32 = arith.constant 0 : i32
    %c0_i32_0 = arith.constant 0 : i32
    return %c0_i32 : i32
  }
  func.func @transform_7(%arg0: i32) -> (i32, i32, i32) {
    %c0_i32 = arith.constant 0 : i32
    %c0_i32_0 = arith.constant 0 : i32
    %c0_i32_1 = arith.constant 0 : i32
    return %c0_i32, %arg0, %c0_i32_0 : i32, i32, i32
  }
  func.func @transform_8(%arg0: i32) -> (i32, i32, i32) {
    %c0_i32 = arith.constant 0 : i32
    %c0_i32_0 = arith.constant 0 : i32
    %c0_i32_1 = arith.constant 0 : i32
    return %c0_i32, %arg0, %c0_i32_0 : i32, i32, i32
  }
}

</mosaic_0001>

<llo_original>
// kernel: postprocessor_forward.1
$region0: #{postprocessor_forward.1}
  #allocation0 [shape = 'u32[]', space=smem, size = 0x4, offset = 0x4, fixed_abs, tag = 'smem constant byte address 0x4 - core index']
  #allocation1 [shape = 'u32[144,128]{1,0:T(1,128)}', space=vmem, size = 0x12000, scoped, tag = 'internal scratch']
  %s0 = inlined_call_operand.vmem [shape: f32[2,128], index: 0, kind: input, shape index: {}]
  %s1 = inlined_call_operand.vmem [shape: f32[2,2,128], index: 1, kind: input, shape index: {}, may-alias: {1,8}]
  %s2 = inlined_call_operand.hbm [shape: bf16[2,128,384], index: 2, kind: input, shape index: {}]
  %s3 = inlined_call_operand.hbm [shape: bf16[2,128,384], index: 3, kind: input, shape index: {}]
  %s4 = inlined_call_operand.vmem [shape: f32[2,1,384], index: 4, kind: input, shape index: {}]
  %s5 = inlined_call_operand.vmem [shape: f32[2,1,128], index: 5, kind: input, shape index: {}]
  %s6 = inlined_call_operand.vmem [shape: f32[4], index: 6, kind: input, shape index: {}]
  %s7 = inlined_call_operand.vmem [shape: f32[2,2,128], index: 7, kind: output, shape index: {0}]
  %s8 = inlined_call_operand.vmem [shape: f32[2,2,128], index: 8, kind: output, shape index: {1}, may-alias: {1,8}]
  %9 = xla_tuple %s7, %s8
  %s10 = sld [smem:[#allocation0]]
  $region58: #{postprocessor_forward.1} parent=0
    _
  %s12 = ssub.s32 1, %s10
  %s13 = scalar_select 0, %s12, %s10
  $region1: #{postprocessor_forward.1} parent=0
    #allocation2 [shape = 'u8[196608]{0}', space=vmem, size = 0x30000, scoped, tag = 'input window, operand 2, single buffered']
    #allocation3 [shape = 's32[1]{0}', space=sflag, size = 0x4, scoped, tag = 'scoped memory for postprocessor_forward.1']
    #allocation4 [shape = 's32[1]{0}', space=sflag, size = 0x4, scoped, tag = 'scoped memory for postprocessor_forward.1']
    #allocation5 [shape = 'u8[196608]{0}', space=vmem, size = 0x30000, scoped, tag = 'input window, operand 3, single buffered']
    #allocation6 [shape = 's32[1]{0}', space=sflag, size = 0x4, scoped, tag = 'scoped memory for postprocessor_forward.1']
    #allocation7 [shape = 'u8[512]{0}', space=smem, size = 0x200, scoped, tag = 'input window, operand 6, single buffered']
    %14 = vsyncpa [#allocation3], 0
    %15 = vsyncpa [#allocation6], 0
    %16 = vsyncpa [#allocation4], 0
    // Predicated region
    $region2: #{postprocessor_forward.1} parent=1 // pred_check
      _
    $region3: #{postprocessor_forward.1} parent=1 // pred_check_branch
      %18 = sbr.rel (0) target = $region5
    $region4: #{postprocessor_forward.1} parent=1 // pred_region
      _
    $region5: #{postprocessor_forward.1} parent=1 // pred_fallthru
      _
    // Predicated region
    $region6: #{postprocessor_forward.1} parent=1 // pred_check
      _
    $region7: #{postprocessor_forward.1} parent=1 // pred_check_branch
      %20 = sbr.rel (0) target = $region9
    $region8: #{postprocessor_forward.1} parent=1 // pred_region
      _
    $region9: #{postprocessor_forward.1} parent=1 // pred_fallthru
      _
    // Predicated region
    $region10: #{postprocessor_forward.1} parent=1 // pred_check
      _
    $region11: #{postprocessor_forward.1} parent=1 // pred_check_branch
      %22 = sbr.rel (0) target = $region13
    $region12: #{postprocessor_forward.1} parent=1 // pred_region
      %s24 = ssub.s32 6144, 6144
      %25 = vsyncadd [#allocation3], %s24
      %s26 = sshll.u32 [#allocation2], 4
      %s27 = int_to_ptr.vmem [resolvable:$true] %s26
      %32 = dma.hbm_to_vmem [thread:$0]  %s2, 6144, %s27, [#allocation3], 192, 192, 12
    $region13: #{postprocessor_forward.1} parent=1 // pred_fallthru
      _
    // Predicated region
    $region14: #{postprocessor_forward.1} parent=1 // pred_check
      _
    $region15: #{postprocessor_forward.1} parent=1 // pred_check_branch
      %34 = sbr.rel (0) target = $region17
    $region16: #{postprocessor_forward.1} parent=1 // pred_region
      %s36 = ssub.s32 6144, 6144
      %37 = vsyncadd [#allocation6], %s36
      %s38 = sshll.u32 [#allocation5], 4
      %s39 = int_to_ptr.vmem [resolvable:$true] %s38
      %44 = dma.hbm_to_vmem [thread:$0]  %s3, 6144, %s39, [#allocation6], 192, 192, 12
    $region17: #{postprocessor_forward.1} parent=1 // pred_fallthru
      _
    // Predicated region
    $region18: #{postprocessor_forward.1} parent=1 // pred_check
      _
    $region19: #{postprocessor_forward.1} parent=1 // pred_check_branch
      %46 = sbr.rel (0) target = $region21
    $region20: #{postprocessor_forward.1} parent=1 // pred_region
      _
    $region21: #{postprocessor_forward.1} parent=1 // pred_fallthru
      _
    // Predicated region
    $region22: #{postprocessor_forward.1} parent=1 // pred_check
      _
    $region23: #{postprocessor_forward.1} parent=1 // pred_check_branch
      %48 = sbr.rel (0) target = $region25
    $region24: #{postprocessor_forward.1} parent=1 // pred_region
      _
    $region25: #{postprocessor_forward.1} parent=1 // pred_fallthru
      _
    // Predicated region
    $region26: #{postprocessor_forward.1} parent=1 // pred_check
      _
    $region27: #{postprocessor_forward.1} parent=1 // pred_check_branch
      %50 = sbr.rel (0) target = $region29
    $region28: #{postprocessor_forward.1} parent=1 // pred_region
      %s52 = ssub.s32 16, 16
      %53 = vsyncadd [#allocation4], %s52
      %s55 = sshll.u32 %s6, 4
      %s56 = int_to_ptr.vmem [resolvable:$true] %s55
      %58 = dma.vmem_to_smem %s56, 16, [#allocation7], [#allocation4]
    $region29: #{postprocessor_forward.1} parent=1 // pred_fallthru
      _
    // Predicated region
    $region30: #{postprocessor_forward.1} parent=1 // pred_check
      _
    $region31: #{postprocessor_forward.1} parent=1 // pred_check_branch
      %60 = sbr.rel (0) target = $region33
    $region32: #{postprocessor_forward.1} parent=1 // pred_region
      %61 = dma.done [#allocation3], 6144
    $region33: #{postprocessor_forward.1} parent=1 // pred_fallthru
      _
    // Predicated region
    $region34: #{postprocessor_forward.1} parent=1 // pred_check
      _
    $region35: #{postprocessor_forward.1} parent=1 // pred_check_branch
      %63 = sbr.rel (0) target = $region37
    $region36: #{postprocessor_forward.1} parent=1 // pred_region
      %64 = dma.done [#allocation6], 6144
    $region37: #{postprocessor_forward.1} parent=1 // pred_fallthru
      _
    // Predicated region
    $region38: #{postprocessor_forward.1} parent=1 // pred_check
      _
    $region39: #{postprocessor_forward.1} parent=1 // pred_check_branch
      %66 = sbr.rel (0) target = $region41
    $region40: #{postprocessor_forward.1} parent=1 // pred_region
      %67 = dma.done [#allocation4], 16
    $region41: #{postprocessor_forward.1} parent=1 // pred_fallthru
      _
    %68 = sfence
    %v70 = vld [vmem:[%s1] sm:$0x3]
    %s71 = scalar_lea.vmem %s1, 2
    %v72 = vld [vmem:[%s71] sm:$0x3]
    %v73 = vpack.c.bf16 %v70, %v70
    %v74 = vld [vmem:[#allocation5] sm:$0xff]
    %v75 = vld [vmem:[#allocation5 + $0x8] sm:$0xf]
    %v76 = vld [vmem:[#allocation5 + $0xc] sm:$0xff]
    %v77 = vld [vmem:[#allocation5 + $0x14] sm:$0xf]
    %v78 = vld [vmem:[#allocation5 + $0x18] sm:$0xff]
    %v79 = vld [vmem:[#allocation5 + $0x20] sm:$0xf]
    %v80 = vld [vmem:[#allocation5 + $0x24] sm:$0xff]
    %v81 = vld [vmem:[#allocation5 + $0x2c] sm:$0xf]
    %v82 = vld [vmem:[#allocation5 + $0x30] sm:$0xff]
    %v83 = vld [vmem:[#allocation5 + $0x38] sm:$0xf]
    %v84 = vld [vmem:[#allocation5 + $0x3c] sm:$0xff]
    %v85 = vld [vmem:[#allocation5 + $0x44] sm:$0xf]
    %v86 = vld [vmem:[#allocation5 + $0x48] sm:$0xff]
    %v87 = vld [vmem:[#allocation5 + $0x50] sm:$0xf]
    %v88 = vld [vmem:[#allocation5 + $0x54] sm:$0xff]
    %v89 = vld [vmem:[#allocation5 + $0x5c] sm:$0xf]
    %v90 = vld [vmem:[#allocation5 + $0x60] sm:$0xff]
    %v91 = vld [vmem:[#allocation5 + $0x68] sm:$0xf]
    %v92 = vld [vmem:[#allocation5 + $0x6c] sm:$0xff]
    %v93 = vld [vmem:[#allocation5 + $0x74] sm:$0xf]
    %v94 = vld [vmem:[#allocation5 + $0x78] sm:$0xff]
    %v95 = vld [vmem:[#allocation5 + $0x80] sm:$0xf]
    %v96 = vld [vmem:[#allocation5 + $0x84] sm:$0xff]
    %v97 = vld [vmem:[#allocation5 + $0x8c] sm:$0xf]
    %v98 = vld [vmem:[#allocation5 + $0x90] sm:$0xff]
    %v99 = vld [vmem:[#allocation5 + $0x98] sm:$0xf]
    %v100 = vld [vmem:[#allocation5 + $0x9c] sm:$0xff]
    %v101 = vld [vmem:[#allocation5 + $0xa4] sm:$0xf]
    %v102 = vld [vmem:[#allocation5 + $0xa8] sm:$0xff]
    %v103 = vld [vmem:[#allocation5 + $0xb0] sm:$0xf]
    %v104 = vld [vmem:[#allocation5 + $0xb4] sm:$0xff]
    %v105 = vld [vmem:[#allocation5 + $0xbc] sm:$0xf]
    %v138 = vunpack.c.l.b16 %v74
    %v139 = vunpack.c.h.b16 %v74
    %v140 = vunpack.c.l.b16 %v75
    %v141 = vunpack.c.l.b16 %v76
    %v142 = vunpack.c.h.b16 %v76
    %v143 = vunpack.c.l.b16 %v77
    %v144 = vunpack.c.l.b16 %v78
    %v145 = vunpack.c.h.b16 %v78
    %v146 = vunpack.c.l.b16 %v79
    %v147 = vunpack.c.l.b16 %v80
    %v148 = vunpack.c.h.b16 %v80
    %v149 = vunpack.c.l.b16 %v81
    %v150 = vunpack.c.l.b16 %v82
    %v151 = vunpack.c.h.b16 %v82
    %v152 = vunpack.c.l.b16 %v83
    %v153 = vunpack.c.l.b16 %v84
    %v154 = vunpack.c.h.b16 %v84
    %v155 = vunpack.c.l.b16 %v85
    %v156 = vunpack.c.l.b16 %v86
    %v157 = vunpack.c.h.b16 %v86
    %v158 = vunpack.c.l.b16 %v87
    %v159 = vunpack.c.l.b16 %v88
    %v160 = vunpack.c.h.b16 %v88
    %v161 = vunpack.c.l.b16 %v89
    %v162 = vunpack.c.l.b16 %v90
    %v163 = vunpack.c.h.b16 %v90
    %v164 = vunpack.c.l.b16 %v91
    %v165 = vunpack.c.l.b16 %v92
    %v166 = vunpack.c.h.b16 %v92
    %v167 = vunpack.c.l.b16 %v93
    %v168 = vunpack.c.l.b16 %v94
    %v169 = vunpack.c.h.b16 %v94
    %v170 = vunpack.c.l.b16 %v95
    %v171 = vunpack.c.l.b16 %v96
    %v172 = vunpack.c.h.b16 %v96
    %v173 = vunpack.c.l.b16 %v97
    %v174 = vunpack.c.l.b16 %v98
    %v175 = vunpack.c.h.b16 %v98
    %v176 = vunpack.c.l.b16 %v99
    %v177 = vunpack.c.l.b16 %v100
    %v178 = vunpack.c.h.b16 %v100
    %v179 = vunpack.c.l.b16 %v101
    %v180 = vunpack.c.l.b16 %v102
    %v181 = vunpack.c.h.b16 %v102
    %v182 = vunpack.c.l.b16 %v103
    %v183 = vunpack.c.l.b16 %v104
    %v184 = vunpack.c.h.b16 %v104
    %v185 = vunpack.c.l.b16 %v105
    %v186 = vpack.c.b16 %v141, %v138
    %v187 = vpack.c.b16 %v142, %v139
    %v188 = vpack.c.b16 %v143, %v140
    %v189 = vpack.c.b16 %v147, %v144
    %v190 = vpack.c.b16 %v148, %v145
    %v191 = vpack.c.b16 %v149, %v146
    %v192 = vpack.c.b16 %v153, %v150
    %v193 = vpack.c.b16 %v154, %v151
    %v194 = vpack.c.b16 %v155, %v152
    %v195 = vpack.c.b16 %v159, %v156
    %v196 = vpack.c.b16 %v160, %v157
    %v197 = vpack.c.b16 %v161, %v158
    %v198 = vpack.c.b16 %v165, %v162
    %v199 = vpack.c.b16 %v166, %v163
    %v200 = vpack.c.b16 %v167, %v164
    %v201 = vpack.c.b16 %v171, %v168
    %v202 = vpack.c.b16 %v172, %v169
    %v203 = vpack.c.b16 %v173, %v170
    %v204 = vpack.c.b16 %v177, %v174
    %v205 = vpack.c.b16 %v178, %v175
    %v206 = vpack.c.b16 %v179, %v176
    %v207 = vpack.c.b16 %v183, %v180
    %v208 = vpack.c.b16 %v184, %v181
    %v209 = vpack.c.b16 %v185, %v182
    %234 = vmatprep.subr.bf16.mxu0 %v187
    %235 = vmatpush1.bf16.msra.mxu0 %v186
    %236 = vmatprep.subr.bf16.mxu0 %v190
    %237 = vmatpush1.bf16.msra.mxu0 %v189
    %238 = vmatprep.subr.bf16.mxu0 %v193
    %239 = vmatpush1.bf16.msra.mxu0 %v192
    %240 = vmatprep.subr.bf16.mxu0 %v196
    %241 = vmatpush1.bf16.msra.mxu0 %v195
    %242 = vmatprep.subr.bf16.mxu0 %v199
    %243 = vmatpush1.bf16.msra.mxu0 %v198
    %244 = vmatprep.subr.bf16.mxu0 %v202
    %245 = vmatpush1.bf16.msra.mxu0 %v201
    %246 = vmatprep.subr.bf16.mxu0 %v205
    %247 = vmatpush1.bf16.msra.mxu0 %v204
    %248 = vmatprep.subr.bf16.mxu0 %v208
    %249 = vmatpush1.bf16.msra.mxu0 %v207
    %250 = vmatprep.subr.bf16.mxu0 0
    %251 = vmatpush1.bf16.msra.mxu0 0
    %252 = vmatprep.subr.bf16.mxu0 0
    %253 = vmatpush1.bf16.msra.mxu0 0
    %254 = vmatprep.subr.bf16.mxu0 0
    %255 = vmatpush1.bf16.msra.mxu0 0
    %256 = vmatprep.subr.bf16.mxu0 0
    %257 = vmatpush1.bf16.msra.mxu0 0
    %258 = vmatprep.subr.bf16.mxu0 0
    %259 = vmatpush1.bf16.msra.mxu0 0
    %260 = vmatprep.subr.bf16.mxu0 0
    %261 = vmatpush1.bf16.msra.mxu0 0
    %262 = vmatprep.subr.bf16.mxu0 0
    %263 = vmatpush1.bf16.msra.mxu0 0
    %264 = vmatprep.subr.bf16.mxu0 0
    %265 = vmatpush1.bf16.msra.mxu0 0
    %266 = vmatprep.mubr.bf16.mxu0 0
    %267 = vmatmul.mubr.bf16.gmra.mrb[0].mxu0 %v73
    %v268 = vpop.f32.mrb[0].mxu0
    %v269 = vadd.f32 0.0, %v268
    %v270 = vpop.f32.mrb[0].mxu0
    %v271 = vadd.f32 0.0, %v270
    %v272 = vpop.f32.mrb[0].mxu0
    %v273 = vpop.f32.mrb[0].mxu0
    %274 = vdwg.mxu0
    %275 = vmatprep.subr.bf16.mxu0 0
    %276 = vmatpush1.bf16.msra.mxu0 %v188
    %277 = vmatprep.subr.bf16.mxu0 0
    %278 = vmatpush1.bf16.msra.mxu0 %v191
    %279 = vmatprep.subr.bf16.mxu0 0
    %280 = vmatpush1.bf16.msra.mxu0 %v194
    %281 = vmatprep.subr.bf16.mxu0 0
    %282 = vmatpush1.bf16.msra.mxu0 %v197
    %283 = vmatprep.subr.bf16.mxu0 0
    %284 = vmatpush1.bf16.msra.mxu0 %v200
    %285 = vmatprep.subr.bf16.mxu0 0
    %286 = vmatpush1.bf16.msra.mxu0 %v203
    %287 = vmatprep.subr.bf16.mxu0 0
    %288 = vmatpush1.bf16.msra.mxu0 %v206
    %289 = vmatprep.subr.bf16.mxu0 0
    %290 = vmatpush1.bf16.msra.mxu0 %v209
    %291 = vmatprep.subr.bf16.mxu0 0
    %292 = vmatpush1.bf16.msra.mxu0 0
    %293 = vmatprep.subr.bf16.mxu0 0
    %294 = vmatpush1.bf16.msra.mxu0 0
    %295 = vmatprep.subr.bf16.mxu0 0
    %296 = vmatpush1.bf16.msra.mxu0 0
    %297 = vmatprep.subr.bf16.mxu0 0
    %298 = vmatpush1.bf16.msra.mxu0 0
    %299 = vmatprep.subr.bf16.mxu0 0
    %300 = vmatpush1.bf16.msra.mxu0 0
    %301 = vmatprep.subr.bf16.mxu0 0
    %302 = vmatpush1.bf16.msra.mxu0 0
    %303 = vmatprep.subr.bf16.mxu0 0
    %304 = vmatpush1.bf16.msra.mxu0 0
    %305 = vmatprep.subr.bf16.mxu0 0
    %306 = vmatpush1.bf16.msra.mxu0 0
    %307 = vmatprep.mubr.bf16.mxu0 0
    %308 = vmatmul.mubr.bf16.gmra.mrb[0].mxu0 %v73
    %v309 = vpop.f32.mrb[0].mxu0
    %v310 = vadd.f32 0.0, %v309
    %v311 = vpop.f32.mrb[0].mxu0
    %v312 = vpop.f32.mrb[0].mxu0
    %v313 = vpop.f32.mrb[0].mxu0
    %314 = vdwg.mxu0
    %v315 = vpack.c.bf16 %v72, %v72
    %s316 = scalar_lea.vmem [#allocation5], 192
    %v317 = vld [vmem:[%s316] sm:$0xff]
    %v318 = vld [vmem:[%s316 + $0x8] sm:$0xf]
    %v319 = vld [vmem:[%s316 + $0xc] sm:$0xff]
    %v320 = vld [vmem:[%s316 + $0x14] sm:$0xf]
    %v321 = vld [vmem:[%s316 + $0x18] sm:$0xff]
    %v322 = vld [vmem:[%s316 + $0x20] sm:$0xf]
    %v323 = vld [vmem:[%s316 + $0x24] sm:$0xff]
    %v324 = vld [vmem:[%s316 + $0x2c] sm:$0xf]
    %v325 = vld [vmem:[%s316 + $0x30] sm:$0xff]
    %v326 = vld [vmem:[%s316 + $0x38] sm:$0xf]
    %v327 = vld [vmem:[%s316 + $0x3c] sm:$0xff]
    %v328 = vld [vmem:[%s316 + $0x44] sm:$0xf]
    %v329 = vld [vmem:[%s316 + $0x48] sm:$0xff]
    %v330 = vld [vmem:[%s316 + $0x50] sm:$0xf]
    %v331 = vld [vmem:[%s316 + $0x54] sm:$0xff]
    %v332 = vld [vmem:[%s316 + $0x5c] sm:$0xf]
    %v333 = vld [vmem:[%s316 + $0x60] sm:$0xff]
    %v334 = vld [vmem:[%s316 + $0x68] sm:$0xf]
    %v335 = vld [vmem:[%s316 + $0x6c] sm:$0xff]
    %v336 = vld [vmem:[%s316 + $0x74] sm:$0xf]
    %v337 = vld [vmem:[%s316 + $0x78] sm:$0xff]
    %v338 = vld [vmem:[%s316 + $0x80] sm:$0xf]
    %v339 = vld [vmem:[%s316 + $0x84] sm:$0xff]
    %v340 = vld [vmem:[%s316 + $0x8c] sm:$0xf]
    %v341 = vld [vmem:[%s316 + $0x90] sm:$0xff]
    %v342 = vld [vmem:[%s316 + $0x98] sm:$0xf]
    %v343 = vld [vmem:[%s316 + $0x9c] sm:$0xff]
    %v344 = vld [vmem:[%s316 + $0xa4] sm:$0xf]
    %v345 = vld [vmem:[%s316 + $0xa8] sm:$0xff]
    %v346 = vld [vmem:[%s316 + $0xb0] sm:$0xf]
    %v347 = vld [vmem:[%s316 + $0xb4] sm:$0xff]
    %v348 = vld [vmem:[%s316 + $0xbc] sm:$0xf]
    %v381 = vunpack.c.l.b16 %v317
    %v382 = vunpack.c.h.b16 %v317
    %v383 = vunpack.c.l.b16 %v318
    %v384 = vunpack.c.l.b16 %v319
    %v385 = vunpack.c.h.b16 %v319
    %v386 = vunpack.c.l.b16 %v320
    %v387 = vunpack.c.l.b16 %v321
    %v388 = vunpack.c.h.b16 %v321
    %v389 = vunpack.c.l.b16 %v322
    %v390 = vunpack.c.l.b16 %v323
    %v391 = vunpack.c.h.b16 %v323
    %v392 = vunpack.c.l.b16 %v324
    %v393 = vunpack.c.l.b16 %v325
    %v394 = vunpack.c.h.b16 %v325
    %v395 = vunpack.c.l.b16 %v326
    %v396 = vunpack.c.l.b16 %v327
    %v397 = vunpack.c.h.b16 %v327
    %v398 = vunpack.c.l.b16 %v328
    %v399 = vunpack.c.l.b16 %v329
    %v400 = vunpack.c.h.b16 %v329
    %v401 = vunpack.c.l.b16 %v330
    %v402 = vunpack.c.l.b16 %v331
    %v403 = vunpack.c.h.b16 %v331
    %v404 = vunpack.c.l.b16 %v332
    %v405 = vunpack.c.l.b16 %v333
    %v406 = vunpack.c.h.b16 %v333
    %v407 = vunpack.c.l.b16 %v334
    %v408 = vunpack.c.l.b16 %v335
    %v409 = vunpack.c.h.b16 %v335
    %v410 = vunpack.c.l.b16 %v336
    %v411 = vunpack.c.l.b16 %v337
    %v412 = vunpack.c.h.b16 %v337
    %v413 = vunpack.c.l.b16 %v338
    %v414 = vunpack.c.l.b16 %v339
    %v415 = vunpack.c.h.b16 %v339
    %v416 = vunpack.c.l.b16 %v340
    %v417 = vunpack.c.l.b16 %v341
    %v418 = vunpack.c.h.b16 %v341
    %v419 = vunpack.c.l.b16 %v342
    %v420 = vunpack.c.l.b16 %v343
    %v421 = vunpack.c.h.b16 %v343
    %v422 = vunpack.c.l.b16 %v344
    %v423 = vunpack.c.l.b16 %v345
    %v424 = vunpack.c.h.b16 %v345
    %v425 = vunpack.c.l.b16 %v346
    %v426 = vunpack.c.l.b16 %v347
    %v427 = vunpack.c.h.b16 %v347
    %v428 = vunpack.c.l.b16 %v348
    %v429 = vpack.c.b16 %v384, %v381
    %v430 = vpack.c.b16 %v385, %v382
    %v431 = vpack.c.b16 %v386, %v383
    %v432 = vpack.c.b16 %v390, %v387
    %v433 = vpack.c.b16 %v391, %v388
    %v434 = vpack.c.b16 %v392, %v389
    %v435 = vpack.c.b16 %v396, %v393
    %v436 = vpack.c.b16 %v397, %v394
    %v437 = vpack.c.b16 %v398, %v395
    %v438 = vpack.c.b16 %v402, %v399
    %v439 = vpack.c.b16 %v403, %v400
    %v440 = vpack.c.b16 %v404, %v401
    %v441 = vpack.c.b16 %v408, %v405
    %v442 = vpack.c.b16 %v409, %v406
    %v443 = vpack.c.b16 %v410, %v407
    %v444 = vpack.c.b16 %v414, %v411
    %v445 = vpack.c.b16 %v415, %v412
    %v446 = vpack.c.b16 %v416, %v413
    %v447 = vpack.c.b16 %v420, %v417
    %v448 = vpack.c.b16 %v421, %v418
    %v449 = vpack.c.b16 %v422, %v419
    %v450 = vpack.c.b16 %v426, %v423
    %v451 = vpack.c.b16 %v427, %v424
    %v452 = vpack.c.b16 %v428, %v425
    %477 = vmatprep.subr.bf16.mxu0 %v430
    %478 = vmatpush1.bf16.msra.mxu0 %v429
    %479 = vmatprep.subr.bf16.mxu0 %v433
    %480 = vmatpush1.bf16.msra.mxu0 %v432
    %481 = vmatprep.subr.bf16.mxu0 %v436
    %482 = vmatpush1.bf16.msra.mxu0 %v435
    %483 = vmatprep.subr.bf16.mxu0 %v439
    %484 = vmatpush1.bf16.msra.mxu0 %v438
    %485 = vmatprep.subr.bf16.mxu0 %v442
    %486 = vmatpush1.bf16.msra.mxu0 %v441
    %487 = vmatprep.subr.bf16.mxu0 %v445
    %488 = vmatpush1.bf16.msra.mxu0 %v444
    %489 = vmatprep.subr.bf16.mxu0 %v448
    %490 = vmatpush1.bf16.msra.mxu0 %v447
    %491 = vmatprep.subr.bf16.mxu0 %v451
    %492 = vmatpush1.bf16.msra.mxu0 %v450
    %493 = vmatprep.subr.bf16.mxu0 0
    %494 = vmatpush1.bf16.msra.mxu0 0
    %495 = vmatprep.subr.bf16.mxu0 0
    %496 = vmatpush1.bf16.msra.mxu0 0
    %497 = vmatprep.subr.bf16.mxu0 0
    %498 = vmatpush1.bf16.msra.mxu0 0
    %499 = vmatprep.subr.bf16.mxu0 0
    %500 = vmatpush1.bf16.msra.mxu0 0
    %501 = vmatprep.subr.bf16.mxu0 0
    %502 = vmatpush1.bf16.msra.mxu0 0
    %503 = vmatprep.subr.bf16.mxu0 0
    %504 = vmatpush1.bf16.msra.mxu0 0
    %505 = vmatprep.subr.bf16.mxu0 0
    %506 = vmatpush1.bf16.msra.mxu0 0
    %507 = vmatprep.subr.bf16.mxu0 0
    %508 = vmatpush1.bf16.msra.mxu0 0
    %509 = vmatprep.mubr.bf16.mxu0 0
    %510 = vmatmul.mubr.bf16.gmra.mrb[0].mxu0 %v315
    %v511 = vpop.f32.mrb[0].mxu0
    %v512 = vadd.f32 0.0, %v511
    %v513 = vpop.f32.mrb[0].mxu0
    %v514 = vadd.f32 0.0, %v513
    %v515 = vpop.f32.mrb[0].mxu0
    %v516 = vpop.f32.mrb[0].mxu0
    %517 = vdwg.mxu0
    %518 = vmatprep.subr.bf16.mxu0 0
    %519 = vmatpush1.bf16.msra.mxu0 %v431
    %520 = vmatprep.subr.bf16.mxu0 0
    %521 = vmatpush1.bf16.msra.mxu0 %v434
    %522 = vmatprep.subr.bf16.mxu0 0
    %523 = vmatpush1.bf16.msra.mxu0 %v437
    %524 = vmatprep.subr.bf16.mxu0 0
    %525 = vmatpush1.bf16.msra.mxu0 %v440
    %526 = vmatprep.subr.bf16.mxu0 0
    %527 = vmatpush1.bf16.msra.mxu0 %v443
    %528 = vmatprep.subr.bf16.mxu0 0
    %529 = vmatpush1.bf16.msra.mxu0 %v446
    %530 = vmatprep.subr.bf16.mxu0 0
    %531 = vmatpush1.bf16.msra.mxu0 %v449
    %532 = vmatprep.subr.bf16.mxu0 0
    %533 = vmatpush1.bf16.msra.mxu0 %v452
    %534 = vmatprep.subr.bf16.mxu0 0
    %535 = vmatpush1.bf16.msra.mxu0 0
    %536 = vmatprep.subr.bf16.mxu0 0
    %537 = vmatpush1.bf16.msra.mxu0 0
    %538 = vmatprep.subr.bf16.mxu0 0
    %539 = vmatpush1.bf16.msra.mxu0 0
    %540 = vmatprep.subr.bf16.mxu0 0
    %541 = vmatpush1.bf16.msra.mxu0 0
    %542 = vmatprep.subr.bf16.mxu0 0
    %543 = vmatpush1.bf16.msra.mxu0 0
    %544 = vmatprep.subr.bf16.mxu0 0
    %545 = vmatpush1.bf16.msra.mxu0 0
    %546 = vmatprep.subr.bf16.mxu0 0
    %547 = vmatpush1.bf16.msra.mxu0 0
    %548 = vmatprep.subr.bf16.mxu0 0
    %549 = vmatpush1.bf16.msra.mxu0 0
    %550 = vmatprep.mubr.bf16.mxu0 0
    %551 = vmatmul.mubr.bf16.gmra.mrb[0].mxu0 %v315
    %v552 = vpop.f32.mrb[0].mxu0
    %v553 = vadd.f32 0.0, %v552
    %v554 = vpop.f32.mrb[0].mxu0
    %v555 = vpop.f32.mrb[0].mxu0
    %v556 = vpop.f32.mrb[0].mxu0
    %557 = vdwg.mxu0
    %v558 = vld [vmem:[%s0] sm:$0x3]
    %v559 = vpack.c.bf16 %v558, %v558
    %v560 = vld [vmem:[#allocation2] sm:$0xff]
    %v561 = vld [vmem:[#allocation2 + $0x8] sm:$0xf]
    %v562 = vld [vmem:[#allocation2 + $0xc] sm:$0xff]
    %v563 = vld [vmem:[#allocation2 + $0x14] sm:$0xf]
    %v564 = vld [vmem:[#allocation2 + $0x18] sm:$0xff]
    %v565 = vld [vmem:[#allocation2 + $0x20] sm:$0xf]
    %v566 = vld [vmem:[#allocation2 + $0x24] sm:$0xff]
    %v567 = vld [vmem:[#allocation2 + $0x2c] sm:$0xf]
    %v568 = vld [vmem:[#allocation2 + $0x30] sm:$0xff]
    %v569 = vld [vmem:[#allocation2 + $0x38] sm:$0xf]
    %v570 = vld [vmem:[#allocation2 + $0x3c] sm:$0xff]
    %v571 = vld [vmem:[#allocation2 + $0x44] sm:$0xf]
    %v572 = vld [vmem:[#allocation2 + $0x48] sm:$0xff]
    %v573 = vld [vmem:[#allocation2 + $0x50] sm:$0xf]
    %v574 = vld [vmem:[#allocation2 + $0x54] sm:$0xff]
    %v575 = vld [vmem:[#allocation2 + $0x5c] sm:$0xf]
    %v576 = vld [vmem:[#allocation2 + $0x60] sm:$0xff]
    %v577 = vld [vmem:[#allocation2 + $0x68] sm:$0xf]
    %v578 = vld [vmem:[#allocation2 + $0x6c] sm:$0xff]
    %v579 = vld [vmem:[#allocation2 + $0x74] sm:$0xf]
    %v580 = vld [vmem:[#allocation2 + $0x78] sm:$0xff]
    %v581 = vld [vmem:[#allocation2 + $0x80] sm:$0xf]
    %v582 = vld [vmem:[#allocation2 + $0x84] sm:$0xff]
    %v583 = vld [vmem:[#allocation2 + $0x8c] sm:$0xf]
    %v584 = vld [vmem:[#allocation2 + $0x90] sm:$0xff]
    %v585 = vld [vmem:[#allocation2 + $0x98] sm:$0xf]
    %v586 = vld [vmem:[#allocation2 + $0x9c] sm:$0xff]
    %v587 = vld [vmem:[#allocation2 + $0xa4] sm:$0xf]
    %v588 = vld [vmem:[#allocation2 + $0xa8] sm:$0xff]
    %v589 = vld [vmem:[#allocation2 + $0xb0] sm:$0xf]
    %v590 = vld [vmem:[#allocation2 + $0xb4] sm:$0xff]
    %v591 = vld [vmem:[#allocation2 + $0xbc] sm:$0xf]
    %v592 = vld [vmem:[%s4] sm:$0x7]
    %v594 = vlaneseq
    %v595 = vshrl.u32 %v594, 7
    %v596 = vsub.s32 0, %v595
    %v597 = vrot.slane %v592, %v596
    %v598 = vlaneseq
    %v599 = vshrl.u32 %v598, 7
    %v600 = vsub.s32 1, %v599
    %v601 = vrot.slane %v592, %v600
    %v602 = vlaneseq
    %v603 = vshrl.u32 %v602, 7
    %v604 = vsub.s32 2, %v603
    %v605 = vrot.slane %v592, %v604
    %v641 = vunpack.c.l.b16 %v560
    %v642 = vunpack.c.h.b16 %v560
    %v643 = vunpack.c.l.b16 %v561
    %v644 = vunpack.c.l.b16 %v562
    %v645 = vunpack.c.h.b16 %v562
    %v646 = vunpack.c.l.b16 %v563
    %v647 = vunpack.c.l.b16 %v564
    %v648 = vunpack.c.h.b16 %v564
    %v649 = vunpack.c.l.b16 %v565
    %v650 = vunpack.c.l.b16 %v566
    %v651 = vunpack.c.h.b16 %v566
    %v652 = vunpack.c.l.b16 %v567
    %v653 = vunpack.c.l.b16 %v568
    %v654 = vunpack.c.h.b16 %v568
    %v655 = vunpack.c.l.b16 %v569
    %v656 = vunpack.c.l.b16 %v570
    %v657 = vunpack.c.h.b16 %v570
    %v658 = vunpack.c.l.b16 %v571
    %v659 = vunpack.c.l.b16 %v572
    %v660 = vunpack.c.h.b16 %v572
    %v661 = vunpack.c.l.b16 %v573
    %v662 = vunpack.c.l.b16 %v574
    %v663 = vunpack.c.h.b16 %v574
    %v664 = vunpack.c.l.b16 %v575
    %v665 = vunpack.c.l.b16 %v576
    %v666 = vunpack.c.h.b16 %v576
    %v667 = vunpack.c.l.b16 %v577
    %v668 = vunpack.c.l.b16 %v578
    %v669 = vunpack.c.h.b16 %v578
    %v670 = vunpack.c.l.b16 %v579
    %v671 = vunpack.c.l.b16 %v580
    %v672 = vunpack.c.h.b16 %v580
    %v673 = vunpack.c.l.b16 %v581
    %v674 = vunpack.c.l.b16 %v582
    %v675 = vunpack.c.h.b16 %v582
    %v676 = vunpack.c.l.b16 %v583
    %v677 = vunpack.c.l.b16 %v584
    %v678 = vunpack.c.h.b16 %v584
    %v679 = vunpack.c.l.b16 %v585
    %v680 = vunpack.c.l.b16 %v586
    %v681 = vunpack.c.h.b16 %v586
    %v682 = vunpack.c.l.b16 %v587
    %v683 = vunpack.c.l.b16 %v588
    %v684 = vunpack.c.h.b16 %v588
    %v685 = vunpack.c.l.b16 %v589
    %v686 = vunpack.c.l.b16 %v590
    %v687 = vunpack.c.h.b16 %v590
    %v688 = vunpack.c.l.b16 %v591
    %v689 = vpack.c.b16 %v644, %v641
    %v690 = vpack.c.b16 %v645, %v642
    %v691 = vpack.c.b16 %v646, %v643
    %v692 = vpack.c.b16 %v650, %v647
    %v693 = vpack.c.b16 %v651, %v648
    %v694 = vpack.c.b16 %v652, %v649
    %v695 = vpack.c.b16 %v656, %v653
    %v696 = vpack.c.b16 %v657, %v654
    %v697 = vpack.c.b16 %v658, %v655
    %v698 = vpack.c.b16 %v662, %v659
    %v699 = vpack.c.b16 %v663, %v660
    %v700 = vpack.c.b16 %v664, %v661
    %v701 = vpack.c.b16 %v668, %v665
    %v702 = vpack.c.b16 %v669, %v666
    %v703 = vpack.c.b16 %v670, %v667
    %v704 = vpack.c.b16 %v674, %v671
    %v705 = vpack.c.b16 %v675, %v672
    %v706 = vpack.c.b16 %v676, %v673
    %v707 = vpack.c.b16 %v680, %v677
    %v708 = vpack.c.b16 %v681, %v678
    %v709 = vpack.c.b16 %v682, %v679
    %v710 = vpack.c.b16 %v686, %v683
    %v711 = vpack.c.b16 %v687, %v684
    %v712 = vpack.c.b16 %v688, %v685
    %737 = vmatprep.subr.bf16.mxu0 %v690
    %738 = vmatpush1.bf16.msra.mxu0 %v689
    %739 = vmatprep.subr.bf16.mxu0 %v693
    %740 = vmatpush1.bf16.msra.mxu0 %v692
    %741 = vmatprep.subr.bf16.mxu0 %v696
    %742 = vmatpush1.bf16.msra.mxu0 %v695
    %743 = vmatprep.subr.bf16.mxu0 %v699
    %744 = vmatpush1.bf16.msra.mxu0 %v698
    %745 = vmatprep.subr.bf16.mxu0 %v702
    %746 = vmatpush1.bf16.msra.mxu0 %v701
    %747 = vmatprep.subr.bf16.mxu0 %v705
    %748 = vmatpush1.bf16.msra.mxu0 %v704
    %749 = vmatprep.subr.bf16.mxu0 %v708
    %750 = vmatpush1.bf16.msra.mxu0 %v707
    %751 = vmatprep.subr.bf16.mxu0 %v711
    %752 = vmatpush1.bf16.msra.mxu0 %v710
    %753 = vmatprep.subr.bf16.mxu0 0
    %754 = vmatpush1.bf16.msra.mxu0 0
    %755 = vmatprep.subr.bf16.mxu0 0
    %756 = vmatpush1.bf16.msra.mxu0 0
    %757 = vmatprep.subr.bf16.mxu0 0
    %758 = vmatpush1.bf16.msra.mxu0 0
    %759 = vmatprep.subr.bf16.mxu0 0
    %760 = vmatpush1.bf16.msra.mxu0 0
    %761 = vmatprep.subr.bf16.mxu0 0
    %762 = vmatpush1.bf16.msra.mxu0 0
    %763 = vmatprep.subr.bf16.mxu0 0
    %764 = vmatpush1.bf16.msra.mxu0 0
    %765 = vmatprep.subr.bf16.mxu0 0
    %766 = vmatpush1.bf16.msra.mxu0 0
    %767 = vmatprep.subr.bf16.mxu0 0
    %768 = vmatpush1.bf16.msra.mxu0 0
    %769 = vmatprep.mubr.bf16.mxu0 0
    %770 = vmatmul.mubr.bf16.gmra.mrb[0].mxu0 %v559
    %v771 = vpop.f32.mrb[0].mxu0
    %v772 = vadd.f32 %v597, %v771
    %v773 = vpop.f32.mrb[0].mxu0
    %v774 = vadd.f32 %v601, %v773
    %v775 = vpop.f32.mrb[0].mxu0
    %v776 = vpop.f32.mrb[0].mxu0
    %777 = vdwg.mxu0
    %778 = vmatprep.subr.bf16.mxu0 0
    %779 = vmatpush1.bf16.msra.mxu0 %v691
    %780 = vmatprep.subr.bf16.mxu0 0
    %781 = vmatpush1.bf16.msra.mxu0 %v694
    %782 = vmatprep.subr.bf16.mxu0 0
    %783 = vmatpush1.bf16.msra.mxu0 %v697
    %784 = vmatprep.subr.bf16.mxu0 0
    %785 = vmatpush1.bf16.msra.mxu0 %v700
    %786 = vmatprep.subr.bf16.mxu0 0
    %787 = vmatpush1.bf16.msra.mxu0 %v703
    %788 = vmatprep.subr.bf16.mxu0 0
    %789 = vmatpush1.bf16.msra.mxu0 %v706
    %790 = vmatprep.subr.bf16.mxu0 0
    %791 = vmatpush1.bf16.msra.mxu0 %v709
    %792 = vmatprep.subr.bf16.mxu0 0
    %793 = vmatpush1.bf16.msra.mxu0 %v712
    %794 = vmatprep.subr.bf16.mxu0 0
    %795 = vmatpush1.bf16.msra.mxu0 0
    %796 = vmatprep.subr.bf16.mxu0 0
    %797 = vmatpush1.bf16.msra.mxu0 0
    %798 = vmatprep.subr.bf16.mxu0 0
    %799 = vmatpush1.bf16.msra.mxu0 0
    %800 = vmatprep.subr.bf16.mxu0 0
    %801 = vmatpush1.bf16.msra.mxu0 0
    %802 = vmatprep.subr.bf16.mxu0 0
    %803 = vmatpush1.bf16.msra.mxu0 0
    %804 = vmatprep.subr.bf16.mxu0 0
    %805 = vmatpush1.bf16.msra.mxu0 0
    %806 = vmatprep.subr.bf16.mxu0 0
    %807 = vmatpush1.bf16.msra.mxu0 0
    %808 = vmatprep.subr.bf16.mxu0 0
    %809 = vmatpush1.bf16.msra.mxu0 0
    %810 = vmatprep.mubr.bf16.mxu0 0
    %811 = vmatmul.mubr.bf16.gmra.mrb[0].mxu0 %v559
    %v812 = vpop.f32.mrb[0].mxu0
    %v813 = vadd.f32 %v605, %v812
    %v814 = vpop.f32.mrb[0].mxu0
    %v815 = vpop.f32.mrb[0].mxu0
    %v816 = vpop.f32.mrb[0].mxu0
    %817 = vdwg.mxu0
    %v818 = vadd.f32 %v772, %v269
    %v819 = vxor.u32 %v818, 2147483648
    %v820 = vmul.f32 %v819, 1.442695
    %v821 = vpow.pop %v820
    %v822 = vadd.f32 %v821, 1.0
    %v823 = vrcp.pop %v822
    %v824 = vmul.f32 1.0, %v823
    %v825 = vadd.f32 %v774, %v271
    %v826 = vxor.u32 %v825, 2147483648
    %v827 = vmul.f32 %v826, 1.442695
    %v828 = vpow.pop %v827
    %v829 = vadd.f32 %v828, 1.0
    %v830 = vrcp.pop %v829
    %v831 = vmul.f32 1.0, %v830
    %v832 = vld [vmem:[%s5] sm:$0x1]
    %v834 = vlaneseq
    %v835 = vshrl.u32 %v834, 7
    %v836 = vsub.s32 0, %v835
    %v837 = vrot.slane %v832, %v836
    %v839 = vadd.f32 %v310, %v837
    %v840 = vmul.f32 %v824, %v839
    %v841 = vadd.f32 %v813, %v840
    %v842 = vtanh.pop %v841
    %v843 = vsub.f32 %v70, %v842
    %v844 = vmul.f32 %v831, %v843
    %v845 = vadd.f32 %v844, %v842
    %846 = vst [vmem:[%s8] sm:$0x3] %v845
    %v847 = vpack.c.bf16 %v845, %v845
    %s848 = scalar_lea.vmem [#allocation2], 192
    %v849 = vld [vmem:[%s848] sm:$0xff]
    %v850 = vld [vmem:[%s848 + $0x8] sm:$0xf]
    %v851 = vld [vmem:[%s848 + $0xc] sm:$0xff]
    %v852 = vld [vmem:[%s848 + $0x14] sm:$0xf]
    %v853 = vld [vmem:[%s848 + $0x18] sm:$0xff]
    %v854 = vld [vmem:[%s848 + $0x20] sm:$0xf]
    %v855 = vld [vmem:[%s848 + $0x24] sm:$0xff]
    %v856 = vld [vmem:[%s848 + $0x2c] sm:$0xf]
    %v857 = vld [vmem:[%s848 + $0x30] sm:$0xff]
    %v858 = vld [vmem:[%s848 + $0x38] sm:$0xf]
    %v859 = vld [vmem:[%s848 + $0x3c] sm:$0xff]
    %v860 = vld [vmem:[%s848 + $0x44] sm:$0xf]
    %v861 = vld [vmem:[%s848 + $0x48] sm:$0xff]
    %v862 = vld [vmem:[%s848 + $0x50] sm:$0xf]
    %v863 = vld [vmem:[%s848 + $0x54] sm:$0xff]
    %v864 = vld [vmem:[%s848 + $0x5c] sm:$0xf]
    %v865 = vld [vmem:[%s848 + $0x60] sm:$0xff]
    %v866 = vld [vmem:[%s848 + $0x68] sm:$0xf]
    %v867 = vld [vmem:[%s848 + $0x6c] sm:$0xff]
    %v868 = vld [vmem:[%s848 + $0x74] sm:$0xf]
    %v869 = vld [vmem:[%s848 + $0x78] sm:$0xff]
    %v870 = vld [vmem:[%s848 + $0x80] sm:$0xf]
    %v871 = vld [vmem:[%s848 + $0x84] sm:$0xff]
    %v872 = vld [vmem:[%s848 + $0x8c] sm:$0xf]
    %v873 = vld [vmem:[%s848 + $0x90] sm:$0xff]
    %v874 = vld [vmem:[%s848 + $0x98] sm:$0xf]
    %v875 = vld [vmem:[%s848 + $0x9c] sm:$0xff]
    %v876 = vld [vmem:[%s848 + $0xa4] sm:$0xf]
    %v877 = vld [vmem:[%s848 + $0xa8] sm:$0xff]
    %v878 = vld [vmem:[%s848 + $0xb0] sm:$0xf]
    %v879 = vld [vmem:[%s848 + $0xb4] sm:$0xff]
    %v880 = vld [vmem:[%s848 + $0xbc] sm:$0xf]
    %s881 = scalar_lea.vmem %s4, 3
    %v882 = vld [vmem:[%s881] sm:$0x7]
    %v884 = vlaneseq
    %v885 = vshrl.u32 %v884, 7
    %v886 = vsub.s32 0, %v885
    %v887 = vrot.slane %v882, %v886
    %v888 = vlaneseq
    %v889 = vshrl.u32 %v888, 7
    %v890 = vsub.s32 1, %v889
    %v891 = vrot.slane %v882, %v890
    %v892 = vlaneseq
    %v893 = vshrl.u32 %v892, 7
    %v894 = vsub.s32 2, %v893
    %v895 = vrot.slane %v882, %v894
    %v931 = vunpack.c.l.b16 %v849
    %v932 = vunpack.c.h.b16 %v849
    %v933 = vunpack.c.l.b16 %v850
    %v934 = vunpack.c.l.b16 %v851
    %v935 = vunpack.c.h.b16 %v851
    %v936 = vunpack.c.l.b16 %v852
    %v937 = vunpack.c.l.b16 %v853
    %v938 = vunpack.c.h.b16 %v853
    %v939 = vunpack.c.l.b16 %v854
    %v940 = vunpack.c.l.b16 %v855
    %v941 = vunpack.c.h.b16 %v855
    %v942 = vunpack.c.l.b16 %v856
    %v943 = vunpack.c.l.b16 %v857
    %v944 = vunpack.c.h.b16 %v857
    %v945 = vunpack.c.l.b16 %v858
    %v946 = vunpack.c.l.b16 %v859
    %v947 = vunpack.c.h.b16 %v859
    %v948 = vunpack.c.l.b16 %v860
    %v949 = vunpack.c.l.b16 %v861
    %v950 = vunpack.c.h.b16 %v861
    %v951 = vunpack.c.l.b16 %v862
    %v952 = vunpack.c.l.b16 %v863
    %v953 = vunpack.c.h.b16 %v863
    %v954 = vunpack.c.l.b16 %v864
    %v955 = vunpack.c.l.b16 %v865
    %v956 = vunpack.c.h.b16 %v865
    %v957 = vunpack.c.l.b16 %v866
    %v958 = vunpack.c.l.b16 %v867
    %v959 = vunpack.c.h.b16 %v867
    %v960 = vunpack.c.l.b16 %v868
    %v961 = vunpack.c.l.b16 %v869
    %v962 = vunpack.c.h.b16 %v869
    %v963 = vunpack.c.l.b16 %v870
    %v964 = vunpack.c.l.b16 %v871
    %v965 = vunpack.c.h.b16 %v871
    %v966 = vunpack.c.l.b16 %v872
    %v967 = vunpack.c.l.b16 %v873
    %v968 = vunpack.c.h.b16 %v873
    %v969 = vunpack.c.l.b16 %v874
    %v970 = vunpack.c.l.b16 %v875
    %v971 = vunpack.c.h.b16 %v875
    %v972 = vunpack.c.l.b16 %v876
    %v973 = vunpack.c.l.b16 %v877
    %v974 = vunpack.c.h.b16 %v877
    %v975 = vunpack.c.l.b16 %v878
    %v976 = vunpack.c.l.b16 %v879
    %v977 = vunpack.c.h.b16 %v879
    %v978 = vunpack.c.l.b16 %v880
    %v979 = vpack.c.b16 %v934, %v931
    %v980 = vpack.c.b16 %v935, %v932
    %v981 = vpack.c.b16 %v936, %v933
    %v982 = vpack.c.b16 %v940, %v937
    %v983 = vpack.c.b16 %v941, %v938
    %v984 = vpack.c.b16 %v942, %v939
    %v985 = vpack.c.b16 %v946, %v943
    %v986 = vpack.c.b16 %v947, %v944
    %v987 = vpack.c.b16 %v948, %v945
    %v988 = vpack.c.b16 %v952, %v949
    %v989 = vpack.c.b16 %v953, %v950
    %v990 = vpack.c.b16 %v954, %v951
    %v991 = vpack.c.b16 %v958, %v955
    %v992 = vpack.c.b16 %v959, %v956
    %v993 = vpack.c.b16 %v960, %v957
    %v994 = vpack.c.b16 %v964, %v961
    %v995 = vpack.c.b16 %v965, %v962
    %v996 = vpack.c.b16 %v966, %v963
    %v997 = vpack.c.b16 %v970, %v967
    %v998 = vpack.c.b16 %v971, %v968
    %v999 = vpack.c.b16 %v972, %v969
    %v1000 = vpack.c.b16 %v976, %v973
    %v1001 = vpack.c.b16 %v977, %v974
    %v1002 = vpack.c.b16 %v978, %v975
    %1027 = vmatprep.subr.bf16.mxu0 %v980
    %1028 = vmatpush1.bf16.msra.mxu0 %v979
    %1029 = vmatprep.subr.bf16.mxu0 %v983
    %1030 = vmatpush1.bf16.msra.mxu0 %v982
    %1031 = vmatprep.subr.bf16.mxu0 %v986
    %1032 = vmatpush1.bf16.msra.mxu0 %v985
    %1033 = vmatprep.subr.bf16.mxu0 %v989
    %1034 = vmatpush1.bf16.msra.mxu0 %v988
    %1035 = vmatprep.subr.bf16.mxu0 %v992
    %1036 = vmatpush1.bf16.msra.mxu0 %v991
    %1037 = vmatprep.subr.bf16.mxu0 %v995
    %1038 = vmatpush1.bf16.msra.mxu0 %v994
    %1039 = vmatprep.subr.bf16.mxu0 %v998
    %1040 = vmatpush1.bf16.msra.mxu0 %v997
    %1041 = vmatprep.subr.bf16.mxu0 %v1001
    %1042 = vmatpush1.bf16.msra.mxu0 %v1000
    %1043 = vmatprep.subr.bf16.mxu0 0
    %1044 = vmatpush1.bf16.msra.mxu0 0
    %1045 = vmatprep.subr.bf16.mxu0 0
    %1046 = vmatpush1.bf16.msra.mxu0 0
    %1047 = vmatprep.subr.bf16.mxu0 0
    %1048 = vmatpush1.bf16.msra.mxu0 0
    %1049 = vmatprep.subr.bf16.mxu0 0
    %1050 = vmatpush1.bf16.msra.mxu0 0
    %1051 = vmatprep.subr.bf16.mxu0 0
    %1052 = vmatpush1.bf16.msra.mxu0 0
    %1053 = vmatprep.subr.bf16.mxu0 0
    %1054 = vmatpush1.bf16.msra.mxu0 0
    %1055 = vmatprep.subr.bf16.mxu0 0
    %1056 = vmatpush1.bf16.msra.mxu0 0
    %1057 = vmatprep.subr.bf16.mxu0 0
    %1058 = vmatpush1.bf16.msra.mxu0 0
    %1059 = vmatprep.mubr.bf16.mxu0 0
    %1060 = vmatmul.mubr.bf16.gmra.mrb[0].mxu0 %v847
    %v1061 = vpop.f32.mrb[0].mxu0
    %v1062 = vadd.f32 %v887, %v1061
    %v1063 = vpop.f32.mrb[0].mxu0
    %v1064 = vadd.f32 %v891, %v1063
    %v1065 = vpop.f32.mrb[0].mxu0
    %v1066 = vpop.f32.mrb[0].mxu0
    %1067 = vdwg.mxu0
    %1068 = vmatprep.subr.bf16.mxu0 0
    %1069 = vmatpush1.bf16.msra.mxu0 %v981
    %1070 = vmatprep.subr.bf16.mxu0 0
    %1071 = vmatpush1.bf16.msra.mxu0 %v984
    %1072 = vmatprep.subr.bf16.mxu0 0
    %1073 = vmatpush1.bf16.msra.mxu0 %v987
    %1074 = vmatprep.subr.bf16.mxu0 0
    %1075 = vmatpush1.bf16.msra.mxu0 %v990
    %1076 = vmatprep.subr.bf16.mxu0 0
    %1077 = vmatpush1.bf16.msra.mxu0 %v993
    %1078 = vmatprep.subr.bf16.mxu0 0
    %1079 = vmatpush1.bf16.msra.mxu0 %v996
    %1080 = vmatprep.subr.bf16.mxu0 0
    %1081 = vmatpush1.bf16.msra.mxu0 %v999
    %1082 = vmatprep.subr.bf16.mxu0 0
    %1083 = vmatpush1.bf16.msra.mxu0 %v1002
    %1084 = vmatprep.subr.bf16.mxu0 0
    %1085 = vmatpush1.bf16.msra.mxu0 0
    %1086 = vmatprep.subr.bf16.mxu0 0
    %1087 = vmatpush1.bf16.msra.mxu0 0
    %1088 = vmatprep.subr.bf16.mxu0 0
    %1089 = vmatpush1.bf16.msra.mxu0 0
    %1090 = vmatprep.subr.bf16.mxu0 0
    %1091 = vmatpush1.bf16.msra.mxu0 0
    %1092 = vmatprep.subr.bf16.mxu0 0
    %1093 = vmatpush1.bf16.msra.mxu0 0
    %1094 = vmatprep.subr.bf16.mxu0 0
    %1095 = vmatpush1.bf16.msra.mxu0 0
    %1096 = vmatprep.subr.bf16.mxu0 0
    %1097 = vmatpush1.bf16.msra.mxu0 0
    %1098 = vmatprep.subr.bf16.mxu0 0
    %1099 = vmatpush1.bf16.msra.mxu0 0
    %1100 = vmatprep.mubr.bf16.mxu0 0
    %1101 = vmatmul.mubr.bf16.gmra.mrb[0].mxu0 %v847
    %v1102 = vpop.f32.mrb[0].mxu0
    %v1103 = vadd.f32 %v895, %v1102
    %v1104 = vpop.f32.mrb[0].mxu0
    %v1105 = vpop.f32.mrb[0].mxu0
    %v1106 = vpop.f32.mrb[0].mxu0
    %1107 = vdwg.mxu0
    %v1108 = vadd.f32 %v1062, %v512
    %v1109 = vxor.u32 %v1108, 2147483648
    %v1110 = vmul.f32 %v1109, 1.442695
    %v1111 = vpow.pop %v1110
    %v1112 = vadd.f32 %v1111, 1.0
    %v1113 = vrcp.pop %v1112
    %v1114 = vmul.f32 1.0, %v1113
    %v1115 = vadd.f32 %v1064, %v514
    %v1116 = vxor.u32 %v1115, 2147483648
    %v1117 = vmul.f32 %v1116, 1.442695
    %v1118 = vpow.pop %v1117
    %v1119 = vadd.f32 %v1118, 1.0
    %v1120 = vrcp.pop %v1119
    %v1121 = vmul.f32 1.0, %v1120
    %s1122 = scalar_lea.vmem %s5, 1
    %v1123 = vld [vmem:[%s1122] sm:$0x1]
    %v1125 = vlaneseq
    %v1126 = vshrl.u32 %v1125, 7
    %v1127 = vsub.s32 0, %v1126
    %v1128 = vrot.slane %v1123, %v1127
    %v1130 = vadd.f32 %v553, %v1128
    %v1131 = vmul.f32 %v1114, %v1130
    %v1132 = vadd.f32 %v1103, %v1131
    %v1133 = vtanh.pop %v1132
    %v1134 = vsub.f32 %v72, %v1133
    %v1135 = vmul.f32 %v1121, %v1134
    %v1136 = vadd.f32 %v1135, %v1133
    %s1137 = scalar_lea.vmem %s8, 2
    %1138 = vst [vmem:[%s1137] sm:$0x3] %v1136
    %s1139 = sld [smem:[#allocation7]]
    %v1140 = vstv %s1139
    %v1141 = vmul.f32 %v1140, %v1136
    %s1142 = sld [smem:[#allocation7 + $0x2]]
    %v1143 = vstv %s1142
    %v1144 = vadd.f32 %v1141, %v1143
    %1145 = vst [vmem:[%s7] sm:$0x3] %v1144
    %s1146 = sld [smem:[#allocation7 + $0x1]]
    %v1147 = vstv %s1146
    %v1148 = vmul.f32 %v1147, %v1136
    %s1149 = sld [smem:[#allocation7 + $0x3]]
    %v1150 = vstv %s1149
    %v1151 = vadd.f32 %v1148, %v1150
    %s1152 = scalar_lea.vmem %s7, 2
    %1153 = vst [vmem:[%s1152] sm:$0x3] %v1151
    // Predicated region
    $region42: #{postprocessor_forward.1} parent=1 // pred_check
      _
    $region43: #{postprocessor_forward.1} parent=1 // pred_check_branch
      %1155 = sbr.rel (0) target = $region45
    $region44: #{postprocessor_forward.1} parent=1 // pred_region
      _
    $region45: #{postprocessor_forward.1} parent=1 // pred_fallthru
      _
    // Predicated region
    $region46: #{postprocessor_forward.1} parent=1 // pred_check
      _
    $region47: #{postprocessor_forward.1} parent=1 // pred_check_branch
      %1157 = sbr.rel (0) target = $region49
    $region48: #{postprocessor_forward.1} parent=1 // pred_region
      _
    $region49: #{postprocessor_forward.1} parent=1 // pred_fallthru
      _
    // Predicated region
    $region50: #{postprocessor_forward.1} parent=1 // pred_check
      _
    $region51: #{postprocessor_forward.1} parent=1 // pred_check_branch
      %1159 = sbr.rel (0) target = $region53
    $region52: #{postprocessor_forward.1} parent=1 // pred_region
      _
    $region53: #{postprocessor_forward.1} parent=1 // pred_fallthru
      _
    // Predicated region
    $region54: #{postprocessor_forward.1} parent=1 // pred_check
      _
    $region55: #{postprocessor_forward.1} parent=1 // pred_check_branch
      %1161 = sbr.rel (0) target = $region57
    $region56: #{postprocessor_forward.1} parent=1 // pred_region
      _
    $region57: #{postprocessor_forward.1} parent=1 // pred_fallthru
      _
    %1162 = vsyncpa [#allocation3], 1
    %1163 = vsyncpa [#allocation6], 1
    %1164 = vsyncpa [#allocation4], 1

</llo_original>
